<compile_context>
chip_gen: v6e
topology: v6e:2x2x1
jax: 0.10.0
libtpu: 0.0.40
codegen_flags: <defaults>
</compile_context>

<pallas_src>
import functools
import math

import jax
import jax.numpy as jnp
from jax.experimental import pallas as pl
from jax.experimental.pallas import tpu as pltpu

LANE_W = 512        # lane-dense last dim (multiple of 128) -> unmasked vst stores
ROW_TILE_MAX = 512  # rows per grid step: 512*512*4B = 1 MiB f32 block per operand


def _noisy_spike_train_kernel(x_ref, m_ref, o_ref, *, alpha):
    # Elementwise in native dtype (bf16 stays bf16 on v6e/v7x).
    x = x_ref[...]
    dt = x.dtype
    lo = jnp.asarray(0.0, dt)
    hi = jnp.asarray(alpha, dt)
    half = jnp.asarray(0.5 * alpha, dt)
    sigx = jnp.clip(x + half, lo, hi)            # InvRectangle surrogate
    heav = (x >= lo).astype(dt)                  # hard spike
    o_ref[...] = (sigx + (heav - sigx) * m_ref[...]).astype(o_ref.dtype)


def _spike_eval_kernel(x_ref, o_ref):
    o_ref[...] = (x_ref[...] >= 0).astype(o_ref.dtype)


def _to_slab(flat, n, padded, lane_w):
    if padded != n:
        # Only hit when numel is not a multiple of LANE_W; pad just the remainder.
        flat = jnp.pad(flat, (0, padded - n))
    return flat.reshape(padded // lane_w, lane_w)


def efficient_noisy_spike(x: jax.Array,
                          mask: jax.Array | None = None,
                          *,
                          alpha: float = 1.0,
                          training: bool = True) -> jax.Array:
    """Pallas TPU implementation of EfficientNoisySpike.forward.

    `mask` is the Bernoulli(1-p) {0,1} float mask (PyTorch caches it in
    self.mask; here the caller creates it once and passes it in).
    """
    # TODO(synk): learnable=True would make alpha a trainable parameter; here it
    # is a fixed compile-time scalar baked into the kernel.
    orig_shape = x.shape
    dtype = x.dtype
    n = math.prod(orig_shape) if orig_shape else 1
    itemsize = jnp.dtype(dtype).itemsize

    rows = pl.cdiv(max(n, 1), LANE_W)
    padded = rows * LANE_W

    x_slab = _to_slab(x.reshape(-1), n, padded, LANE_W)

    # Full-array block when small (block == array is always legal); otherwise
    # 512-row blocks (multiple of 8) with a ragged last block handled by cdiv.
    row_tile = min(ROW_TILE_MAX, rows)
    grid = (pl.cdiv(rows, row_tile),)
    spec = pl.BlockSpec((row_tile, LANE_W), lambda i: (i, 0))

    if training:
        if mask is None:
            raise ValueError("training=True requires a Bernoulli mask")
        m_slab = _to_slab(mask.reshape(-1).astype(dtype), n, padded, LANE_W)
        kernel = functools.partial(_noisy_spike_train_kernel, alpha=float(alpha))
        out = pl.pallas_call(
            kernel,
            out_shape=jax.ShapeDtypeStruct((rows, LANE_W), dtype),
            grid_spec=pltpu.PrefetchScalarGridSpec(
                num_scalar_prefetch=0,
                grid=grid,
                in_specs=[spec, spec],
                out_specs=spec,
            ),
            compiler_params=pltpu.CompilerParams(
                dimension_semantics=("parallel",),
            ),
            cost_estimate=pl.CostEstimate(
                flops=6 * n, transcendentals=0,
                bytes_accessed=3 * n * itemsize),
        )(x_slab, m_slab)
    else:
        out = pl.pallas_call(
            _spike_eval_kernel,
            out_shape=jax.ShapeDtypeStruct((rows, LANE_W), dtype),
            grid_spec=pltpu.PrefetchScalarGridSpec(
                num_scalar_prefetch=0,
                grid=grid,
                in_specs=[spec],
                out_specs=spec,
            ),
            compiler_params=pltpu.CompilerParams(
                dimension_semantics=("parallel",),
            ),
            cost_estimate=pl.CostEstimate(
                flops=n, transcendentals=0,
                bytes_accessed=2 * n * itemsize),
        )(x_slab)

    flat_out = out.reshape(-1)
    if padded != n:
        flat_out = flat_out[:n]
    return flat_out.reshape(orig_shape)


if __name__ == "__main__":
    key = jax.random.PRNGKey(0)
    xkey, mkey = jax.random.split(key)

    alpha = 1.0
    p = 0.1
    x = jax.random.normal(xkey, (2, 4, 16, 16), dtype=jnp.float32)
    # PyTorch creates the mask once (self.mask) with torch.bernoulli(1 - p);
    # here the caller builds it deterministically and passes it in.
    mask = jax.random.bernoulli(mkey, p=1.0 - p, shape=x.shape).astype(x.dtype)

    # Training-mode forward (module default: nn.Module.training == True).
    y_train = jax.block_until_ready(
        efficient_noisy_spike(x, mask, alpha=alpha, training=True))

    # Eval-mode forward.
    y_eval = jax.block_until_ready(
        efficient_noisy_spike(x, alpha=alpha, training=False))

    # Pure-JAX reference.
    sigx = jnp.clip(x + 0.5 * alpha, 0.0, alpha)
    heav = (x >= 0).astype(x.dtype)
    y_train_ref = sigx + (heav - sigx) * mask
    y_eval_ref = heav

    assert y_train.shape == x.shape and y_train.dtype == x.dtype
    assert y_eval.shape == x.shape and y_eval.dtype == x.dtype
    assert jnp.allclose(y_train, y_train_ref, atol=1e-6, rtol=1e-6)
    assert jnp.allclose(y_eval, y_eval_ref, atol=1e-6, rtol=1e-6)

    print("KERNEL_OK")
</pallas_src>

<mosaic_0001>
module attributes {stable_mosaic.version = 11 : i64} {
  func.func @_noisy_spike_train_kernel(%arg0: i32, %arg1: memref<4x512xf32, #tpu.memory_space<vmem>>, %arg2: memref<4x512xf32, #tpu.memory_space<vmem>>, %arg3: memref<4x512xf32, #tpu.memory_space<vmem>>) attributes {dimension_semantics = [#tpu.dimension_semantics<parallel>], iteration_bounds = array<i64: 1>, scalar_prefetch = 0 : i64, scratch_operands = 0 : i64, tpu.core_type = #tpu.core_type<tc>, window_params = [{transform_indices = @transform_0, window_bounds = array<i64: 4, 512>}, {transform_indices = @transform_1, window_bounds = array<i64: 4, 512>}, {transform_indices = @transform_2, window_bounds = array<i64: 4, 512>}]} {
    %c0 = arith.constant 0 : index
    %c0_0 = arith.constant 0 : index
    %0 = vector.load %arg1[%c0, %c0_0] : memref<4x512xf32, #tpu.memory_space<vmem>>, vector<4x512xf32>
    %cst = arith.constant 5.000000e-01 : f32
    %1 = vector.broadcast %cst : f32 to vector<4x512xf32>
    %2 = arith.addf %0, %1 : vector<4x512xf32>
    %cst_1 = arith.constant 0.000000e+00 : f32
    %cst_2 = arith.constant 1.000000e+00 : f32
    %3 = vector.broadcast %cst_1 : f32 to vector<4x512xf32>
    %4 = arith.maximumf %3, %2 : vector<4x512xf32>
    %5 = vector.broadcast %cst_2 : f32 to vector<4x512xf32>
    %6 = arith.minimumf %5, %4 : vector<4x512xf32>
    %cst_3 = arith.constant 0.000000e+00 : f32
    %7 = vector.broadcast %cst_3 : f32 to vector<4x512xf32>
    %8 = arith.cmpf oge, %0, %7 : vector<4x512xf32>
    %9 = arith.extui %8 : vector<4x512xi1> to vector<4x512xi32>
    %10 = arith.sitofp %9 : vector<4x512xi32> to vector<4x512xf32>
    %11 = arith.subf %10, %6 : vector<4x512xf32>
    %c0_4 = arith.constant 0 : index
    %c0_5 = arith.constant 0 : index
    %12 = vector.load %arg2[%c0_4, %c0_5] : memref<4x512xf32, #tpu.memory_space<vmem>>, vector<4x512xf32>
    %13 = arith.mulf %11, %12 : vector<4x512xf32>
    %14 = arith.addf %6, %13 : vector<4x512xf32>
    %c0_6 = arith.constant 0 : index
    %c0_7 = arith.constant 0 : index
    %15 = vector.load %arg3[%c0_6, %c0_7] : memref<4x512xf32, #tpu.memory_space<vmem>>, vector<4x512xf32>
    tpu.vector_store %arg3[%c0_6, %c0_7], %14 {strides = array<i32>} : memref<4x512xf32, #tpu.memory_space<vmem>>, vector<4x512xf32>,
    return
  }
  func.func @transform_0(%arg0: i32) -> (i32, i32) {
    %c0_i32 = arith.constant 0 : i32
    %c0_i32_0 = arith.constant 0 : i32
    return %arg0, %c0_i32 : i32, i32
  }
  func.func @transform_1(%arg0: i32) -> (i32, i32) {
    %c0_i32 = arith.constant 0 : i32
    %c0_i32_0 = arith.constant 0 : i32
    return %arg0, %c0_i32 : i32, i32
  }
  func.func @transform_2(%arg0: i32) -> (i32, i32) {
    %c0_i32 = arith.constant 0 : i32
    %c0_i32_0 = arith.constant 0 : i32
    return %arg0, %c0_i32 : i32, i32
  }
}

</mosaic_0001>

<llo_original>
// kernel: tpu_custom_call.1
$region0: #{tpu_custom_call.1}
  #allocation0 [shape = 'u32[]', space=smem, size = 0x4, offset = 0x4, fixed_abs, tag = 'smem constant byte address 0x4 - core index']
  #allocation1 [shape = 'u32[144,128]{1,0:T(1,128)}', space=vmem, size = 0x12000, scoped, tag = 'internal scratch']
  %s0 = inlined_call_operand.hbm [shape: f32[4,512], index: 0, kind: input, shape index: {}]
  %s1 = inlined_call_operand.hbm [shape: f32[4,512], index: 1, kind: input, shape index: {}]
  %s2 = inlined_call_operand.hbm [shape: f32[4,512], index: 2, kind: output, shape index: {}]
  %s3 = sld [smem:[#allocation0]]
  $region26: #{tpu_custom_call.1} parent=0
    _
  %s5 = ssub.s32 1, %s3
  %s6 = scalar_select 0, %s5, %s3
  $region1: #{tpu_custom_call.1} parent=0
    #allocation2 [shape = 'u8[8192]{0}', space=vmem, size = 0x2000, scoped, tag = 'input window, operand 0, single buffered']
    #allocation3 [shape = 's32[1]{0}', space=sflag, size = 0x4, scoped, tag = 'scoped memory for tpu_custom_call.1']
    #allocation4 [shape = 's32[1]{0}', space=sflag, size = 0x4, scoped, tag = 'scoped memory for tpu_custom_call.1']
    #allocation5 [shape = 'u8[8192]{0}', space=vmem, size = 0x2000, scoped, tag = 'input window, operand 1, single buffered']
    #allocation6 [shape = 's32[1]{0}', space=sflag, size = 0x4, scoped, tag = 'scoped memory for tpu_custom_call.1']
    #allocation7 [shape = 'u8[8192]{0}', space=vmem, size = 0x2000, scoped, tag = 'output window, operand 0, single buffered']
    %7 = vsyncpa [#allocation3], 0
    %8 = vsyncpa [#allocation6], 0
    %9 = vsyncpa [#allocation4], 0
    // Predicated region
    $region2: #{tpu_custom_call.1} parent=1 // pred_check
      _
    $region3: #{tpu_custom_call.1} parent=1 // pred_check_branch
      %11 = sbr.rel (0) target = $region5
    $region4: #{tpu_custom_call.1} parent=1 // pred_region
      %s13 = ssub.s32 256, 256
      %14 = vsyncadd [#allocation3], %s13
      %s16 = sshll.u32 [#allocation2], 4
      %s17 = int_to_ptr.vmem [resolvable:$true] %s16
      %19 = dma.hbm_to_vmem [thread:$0]  %s0, 256, %s17, [#allocation3]
    $region5: #{tpu_custom_call.1} parent=1 // pred_fallthru
      _
    // Predicated region
    $region6: #{tpu_custom_call.1} parent=1 // pred_check
      _
    $region7: #{tpu_custom_call.1} parent=1 // pred_check_branch
      %21 = sbr.rel (0) target = $region9
    $region8: #{tpu_custom_call.1} parent=1 // pred_region
      %s23 = ssub.s32 256, 256
      %24 = vsyncadd [#allocation6], %s23
      %s26 = sshll.u32 [#allocation5], 4
      %s27 = int_to_ptr.vmem [resolvable:$true] %s26
      %29 = dma.hbm_to_vmem [thread:$0]  %s1, 256, %s27, [#allocation6]
    $region9: #{tpu_custom_call.1} parent=1 // pred_fallthru
      _
    // Predicated region
    $region10: #{tpu_custom_call.1} parent=1 // pred_check
      _
    $region11: #{tpu_custom_call.1} parent=1 // pred_check_branch
      %31 = sbr.rel (0) target = $region13
    $region12: #{tpu_custom_call.1} parent=1 // pred_region
      %32 = dma.done [#allocation3], 256
    $region13: #{tpu_custom_call.1} parent=1 // pred_fallthru
      _
    // Predicated region
    $region14: #{tpu_custom_call.1} parent=1 // pred_check
      _
    $region15: #{tpu_custom_call.1} parent=1 // pred_check_branch
      %34 = sbr.rel (0) target = $region17
    $region16: #{tpu_custom_call.1} parent=1 // pred_region
      %35 = dma.done [#allocation6], 256
    $region17: #{tpu_custom_call.1} parent=1 // pred_fallthru
      _
    %v36 = vld [vmem:[#allocation2] sm:$0xff]
    %v37 = vld [vmem:[#allocation2 + $0x8] sm:$0xff]
    %v38 = vadd.f32 %v36, 0.5
    %v39 = vadd.f32 %v37, 0.5
    %v40 = vmax.f32 %v38, 0.0
    %v41 = vmax.f32 %v39, 0.0
    %v42 = vmin.f32 %v40, 1.0
    %v43 = vmin.f32 %v41, 1.0
    %vm44 = vcmp.ge.f32.partialorder %v36, 0.0
    %vm45 = vcmp.ge.f32.partialorder %v37, 0.0
    %v46 = vsel %vm44, 1, 0
    %v47 = vsel %vm45, 1, 0
    %v48 = vcvt.s32.f32 %v46
    %v49 = vcvt.s32.f32 %v47
    %v50 = vsub.f32 %v48, %v42
    %v51 = vsub.f32 %v49, %v43
    %v52 = vld [vmem:[#allocation5] sm:$0xff]
    %v53 = vld [vmem:[#allocation5 + $0x8] sm:$0xff]
    %v54 = vmul.f32 %v50, %v52
    %v55 = vmul.f32 %v51, %v53
    %v56 = vadd.f32 %v42, %v54
    %v57 = vadd.f32 %v43, %v55
    %58 = vst [vmem:[#allocation7] sm:$0xff] %v56
    %59 = vst [vmem:[#allocation7 + $0x8] sm:$0xff] %v57
    // Predicated region
    $region18: #{tpu_custom_call.1} parent=1 // pred_check
      _
    $region19: #{tpu_custom_call.1} parent=1 // pred_check_branch
      %61 = sbr.rel (0) target = $region21
    $region20: #{tpu_custom_call.1} parent=1 // pred_region
      %s63 = ssub.s32 256, 256
      %64 = vsyncadd [#allocation4], %s63
      %s66 = sshll.u32 [#allocation7], 4
      %s67 = int_to_ptr.vmem [resolvable:$true] %s66
      %69 = dma.vmem_to_hbm [thread:$0]  %s67, 256, %s2, [#allocation4]
    $region21: #{tpu_custom_call.1} parent=1 // pred_fallthru
      _
    // Predicated region
    $region22: #{tpu_custom_call.1} parent=1 // pred_check
      _
    $region23: #{tpu_custom_call.1} parent=1 // pred_check_branch
      %71 = sbr.rel (0) target = $region25
    $region24: #{tpu_custom_call.1} parent=1 // pred_region
      %72 = dma.done [#allocation4], 256
    $region25: #{tpu_custom_call.1} parent=1 // pred_fallthru
      _
    %73 = vsyncpa [#allocation3], 1
    %74 = vsyncpa [#allocation6], 1
    %75 = vsyncpa [#allocation4], 1

</llo_original>
